<compile_context>
chip_gen: v6e
topology: v6e:2x2x1
jax: 0.10.0
libtpu: 0.0.40
codegen_flags: <defaults>
</compile_context>

<pallas_src>
import functools

import jax
import jax.numpy as jnp
from jax.experimental import pallas as pl
from jax.experimental.pallas import tpu as pltpu

LN_EPS = 1e-5  # nn.LayerNorm default
LANE = 128


def _round_up(x, m):
    return ((x + m - 1) // m) * m


# ---------------------------------------------------------------------------
# Fused kernel
# ---------------------------------------------------------------------------
def _layernorm_masked(y, gamma, beta, h_actual, h_padded):
    """LayerNorm over the last dim. Lanes >= h_actual must already be zero."""
    inv_h = 1.0 / float(h_actual)
    mean = jnp.sum(y, axis=-1, keepdims=True) * inv_h          # padded lanes are 0
    if h_actual == h_padded:
        centered = y - mean
    else:
        col = jax.lax.broadcasted_iota(jnp.int32, y.shape, y.ndim - 1)
        centered = jnp.where(col < h_actual, y - mean, 0.0)
    var = jnp.sum(centered * centered, axis=-1, keepdims=True) * inv_h  # biased (torch)
    y_hat = (y - mean) * jax.lax.rsqrt(var + LN_EPS)
    # gamma/beta are zero in padded lanes -> padded lanes of the result stay 0.
    return y_hat * gamma + beta


def _fused_mlp_kernel(*refs, num_hidden, hid_actual, hid_padded):
    """refs = x, (w, b, gamma, beta) * num_hidden, w_last, b_last, o_ref."""
    x_ref = refs[0]
    o_ref = refs[-1]

    h = x_ref[...]                       # native dtype row tile (tm, Cin)
    idx = 1
    for _ in range(num_hidden):
        w_ref, b_ref, g_ref, be_ref = refs[idx:idx + 4]
        idx += 4
        # Feed the MXU native-dtype operands; accumulate in f32.
        z = jnp.dot(h.astype(w_ref.dtype), w_ref[...],
                    preferred_element_type=jnp.float32)
        z = z + b_ref[...].astype(jnp.float32)
        z = jnp.maximum(z, 0.0)          # ReLU, f32 VPU (v5e-safe)
        h = _layernorm_masked(z,
                              g_ref[...].astype(jnp.float32),
                              be_ref[...].astype(jnp.float32),
                              hid_actual, hid_padded)
        # TODO(synk): dropout is identity in eval mode; a training kernel would
        # use pltpu.prng_seed + pltpu.prng_random_bits to build the mask.

    w_ref, b_ref = refs[idx], refs[idx + 1]
    y = jnp.dot(h.astype(w_ref.dtype), w_ref[...],
                preferred_element_type=jnp.float32)
    y = y + b_ref[...].astype(jnp.float32)
    o_ref[...] = y.astype(o_ref.dtype)   # lane-dense (tm, 128k) store


# ---------------------------------------------------------------------------
# Wrapper: pad params / rows, one fused pallas_call, slice result
# ---------------------------------------------------------------------------
def mlp_forward(x, layers, *, tm=256):
    n, in_c = x.shape
    num_layers = len(layers)
    out_c = layers[-1]["w"].shape[1]
    hid = layers[0]["w"].shape[1] if num_layers > 1 else 0

    hid_p = _round_up(hid, LANE) if num_layers > 1 else 0
    out_p = _round_up(out_c, LANE)

    # --- zero-pad parameters to lane-dense widths (exactness preserved) ------
    params = []
    for li, layer in enumerate(layers):
        w, b = layer["w"], layer["b"]
        cout_p = out_p if li == num_layers - 1 else hid_p
        cin_p = w.shape[0] if li == 0 else hid_p
        w = jnp.pad(w, ((0, cin_p - w.shape[0]), (0, cout_p - w.shape[1])))
        b = jnp.pad(b, ((0, 0), (0, cout_p - b.shape[1])))
        params += [w, b]
        if li < num_layers - 1:
            g = jnp.pad(layer["gamma"], ((0, 0), (0, cout_p - layer["gamma"].shape[1])))
            be = jnp.pad(layer["beta"], ((0, 0), (0, cout_p - layer["beta"].shape[1])))
            params += [g, be]

    # --- pad rows to a multiple of the tile (handles ragged N, no assert) ----
    tm_eff = min(tm, _round_up(n, 8))
    n_pad = _round_up(n, tm_eff)
    if n_pad != n:
        x = jnp.pad(x, ((0, n_pad - n), (0, 0)))

    in_specs = [pl.BlockSpec((tm_eff, in_c), lambda i: (i, 0))]
    for p in params:
        r, c = p.shape
        in_specs.append(pl.BlockSpec((r, c), lambda i: (0, 0)))

    kernel = functools.partial(
        _fused_mlp_kernel,
        num_hidden=num_layers - 1,
        hid_actual=hid,
        hid_padded=hid_p,
    )

    out = pl.pallas_call(
        kernel,
        out_shape=jax.ShapeDtypeStruct((n_pad, out_p), x.dtype),
        grid_spec=pltpu.PrefetchScalarGridSpec(
            num_scalar_prefetch=0,
            grid=(n_pad // tm_eff,),
            in_specs=in_specs,
            out_specs=pl.BlockSpec((tm_eff, out_p), lambda i: (i, 0)),
        ),
        compiler_params=pltpu.CompilerParams(
            dimension_semantics=("parallel",),
            vmem_limit_bytes=32 << 20,
        ),
    )(x, *params)

    return out[:n, :out_c]


# ---------------------------------------------------------------------------
# Parameter init (deterministic, mimics nn.Linear / nn.LayerNorm defaults)
# ---------------------------------------------------------------------------
def init_mlp_params(key, in_channels, hidden_channels, out_channels, num_layers):
    dims = [in_channels] + [hidden_channels] * (num_layers - 1) + [out_channels]
    layers = []
    for li in range(num_layers):
        fan_in, fan_out = dims[li], dims[li + 1]
        key, kw, kb = jax.random.split(key, 3)
        bound = 1.0 / jnp.sqrt(fan_in)
        w = jax.random.uniform(kw, (fan_in, fan_out), jnp.float32, -bound, bound)
        b = jax.random.uniform(kb, (1, fan_out), jnp.float32, -bound, bound)
        layer = {"w": w, "b": b}
        if li < num_layers - 1:  # hidden layers get a LayerNorm
            layer["gamma"] = jnp.ones((1, fan_out), jnp.float32)
            layer["beta"] = jnp.zeros((1, fan_out), jnp.float32)
        layers.append(layer)
    return layers


# ---------------------------------------------------------------------------
# Reference (pure JAX) for sanity check
# ---------------------------------------------------------------------------
def mlp_ref(x, layers):
    h = x
    for layer in layers[:-1]:
        y = h @ layer["w"] + layer["b"]
        y = jnp.maximum(y, 0.0)
        mean = jnp.mean(y, axis=-1, keepdims=True)
        var = jnp.mean(jnp.square(y - mean), axis=-1, keepdims=True)
        h = (y - mean) * jax.lax.rsqrt(var + LN_EPS) * layer["gamma"] + layer["beta"]
    return h @ layers[-1]["w"] + layers[-1]["b"]


if __name__ == "__main__":
    key = jax.random.PRNGKey(0)
    k_x, k_p = jax.random.split(key)

    # Small shapes; N deliberately NOT a multiple of 8 to exercise row padding.
    N, IN_C, HID_C, OUT_C, NUM_LAYERS = 19, 32, 64, 16, 3
    x = jax.random.normal(k_x, (N, IN_C), jnp.float32)
    layers = init_mlp_params(k_p, IN_C, HID_C, OUT_C, NUM_LAYERS)

    out = mlp_forward(x, layers)
    out = jax.block_until_ready(out)

    ref = mlp_ref(x, layers)
    assert out.shape == (N, OUT_C)
    assert jnp.allclose(out, ref, atol=1e-4, rtol=1e-4), "mismatch vs reference"

    print("KERNEL_OK")
</pallas_src>

<mosaic_0001>
module attributes {stable_mosaic.version = 11 : i64} {
  func.func @_fused_mlp_kernel(%arg0: i32, %arg1: memref<24x32xf32, #tpu.memory_space<vmem>>, %arg2: memref<32x128xf32, #tpu.memory_space<vmem>>, %arg3: memref<1x128xf32, #tpu.memory_space<vmem>>, %arg4: memref<1x128xf32, #tpu.memory_space<vmem>>, %arg5: memref<1x128xf32, #tpu.memory_space<vmem>>, %arg6: memref<128x128xf32, #tpu.memory_space<vmem>>, %arg7: memref<1x128xf32, #tpu.memory_space<vmem>>, %arg8: memref<1x128xf32, #tpu.memory_space<vmem>>, %arg9: memref<1x128xf32, #tpu.memory_space<vmem>>, %arg10: memref<128x128xf32, #tpu.memory_space<vmem>>, %arg11: memref<1x128xf32, #tpu.memory_space<vmem>>, %arg12: memref<24x128xf32, #tpu.memory_space<vmem>>) attributes {dimension_semantics = [#tpu.dimension_semantics<parallel>], iteration_bounds = array<i64: 1>, scalar_prefetch = 0 : i64, scratch_operands = 0 : i64, tpu.core_type = #tpu.core_type<tc>, window_params = [{transform_indices = @transform_0, window_bounds = array<i64: 24, 32>}, {pipeline_mode = #tpu.pipeline_mode<synchronous>, transform_indices = @transform_1, window_bounds = array<i64: 32, 128>}, {pipeline_mode = #tpu.pipeline_mode<synchronous>, transform_indices = @transform_2, window_bounds = array<i64: 1, 128>}, {pipeline_mode = #tpu.pipeline_mode<synchronous>, transform_indices = @transform_3, window_bounds = array<i64: 1, 128>}, {pipeline_mode = #tpu.pipeline_mode<synchronous>, transform_indices = @transform_4, window_bounds = array<i64: 1, 128>}, {pipeline_mode = #tpu.pipeline_mode<synchronous>, transform_indices = @transform_5, window_bounds = array<i64: 128, 128>}, {pipeline_mode = #tpu.pipeline_mode<synchronous>, transform_indices = @transform_6, window_bounds = array<i64: 1, 128>}, {pipeline_mode = #tpu.pipeline_mode<synchronous>, transform_indices = @transform_7, window_bounds = array<i64: 1, 128>}, {pipeline_mode = #tpu.pipeline_mode<synchronous>, transform_indices = @transform_8, window_bounds = array<i64: 1, 128>}, {pipeline_mode = #tpu.pipeline_mode<synchronous>, transform_indices = @transform_9, window_bounds = array<i64: 128, 128>}, {pipeline_mode = #tpu.pipeline_mode<synchronous>, transform_indices = @transform_10, window_bounds = array<i64: 1, 128>}, {transform_indices = @transform_11, window_bounds = array<i64: 24, 128>}]} {
    %c0 = arith.constant 0 : index
    %c0_0 = arith.constant 0 : index
    %0 = vector.load %arg1[%c0, %c0_0] : memref<24x32xf32, #tpu.memory_space<vmem>>, vector<24x32xf32>
    %c0_1 = arith.constant 0 : index
    %c0_2 = arith.constant 0 : index
    %1 = vector.load %arg2[%c0_1, %c0_2] : memref<32x128xf32, #tpu.memory_space<vmem>>, vector<32x128xf32>
    %cst = arith.constant dense<0.000000e+00> : vector<24x128xf32>
    %2 = tpu.matmul %0, %1, %cst {dimension_numbers = #tpu.dot_dimension_numbers<[1], [0], [0], [1], [0, 0, 1, 1], [], []>} : vector<24x32xf32>, vector<32x128xf32>, vector<24x128xf32> -> vector<24x128xf32>
    %c0_3 = arith.constant 0 : index
    %c0_4 = arith.constant 0 : index
    %3 = vector.load %arg3[%c0_3, %c0_4] : memref<1x128xf32, #tpu.memory_space<vmem>>, vector<1x128xf32>
    %4 = vector.broadcast %3 : vector<1x128xf32> to vector<24x128xf32>
    %5 = arith.addf %2, %4 : vector<24x128xf32>
    %cst_5 = arith.constant 0.000000e+00 : f32
    %6 = vector.broadcast %cst_5 : f32 to vector<24x128xf32>
    %7 = arith.maximumf %5, %6 : vector<24x128xf32>
    %c0_6 = arith.constant 0 : index
    %c0_7 = arith.constant 0 : index
    %8 = vector.load %arg4[%c0_6, %c0_7] : memref<1x128xf32, #tpu.memory_space<vmem>>, vector<1x128xf32>
    %c0_8 = arith.constant 0 : index
    %c0_9 = arith.constant 0 : index
    %9 = vector.load %arg5[%c0_8, %c0_9] : memref<1x128xf32, #tpu.memory_space<vmem>>, vector<1x128xf32>
    %cst_10 = arith.constant dense<0.000000e+00> : vector<24xf32>
    %10 = vector.multi_reduction <add>, %7, %cst_10 [1] : vector<24x128xf32> to vector<24xf32>
    %11 = vector.shape_cast %10 : vector<24xf32> to vector<24x1xf32>
    %cst_11 = arith.constant 1.562500e-02 : f32
    %12 = vector.broadcast %cst_11 : f32 to vector<24x1xf32>
    %13 = arith.mulf %11, %12 : vector<24x1xf32>
    %14 = tpu.iota {dimensions = array<i32: 1>} : vector<24x128xi32>
    %c64_i32 = arith.constant 64 : i32
    %15 = vector.broadcast %c64_i32 : i32 to vector<24x128xi32>
    %16 = arith.cmpi slt, %14, %15 : vector<24x128xi32>
    %17 = vector.broadcast %13 : vector<24x1xf32> to vector<24x128xf32>
    %18 = arith.subf %7, %17 : vector<24x128xf32>
    %cst_12 = arith.constant 0.000000e+00 : f32
    %19 = vector.broadcast %cst_12 : f32 to vector<24x128xf32>
    %20 = arith.select %16, %18, %19 : vector<24x128xi1>, vector<24x128xf32>
    %21 = arith.mulf %20, %20 : vector<24x128xf32>
    %cst_13 = arith.constant dense<0.000000e+00> : vector<24xf32>
    %22 = vector.multi_reduction <add>, %21, %cst_13 [1] : vector<24x128xf32> to vector<24xf32>
    %23 = vector.shape_cast %22 : vector<24xf32> to vector<24x1xf32>
    %cst_14 = arith.constant 1.562500e-02 : f32
    %24 = vector.broadcast %cst_14 : f32 to vector<24x1xf32>
    %25 = arith.mulf %23, %24 : vector<24x1xf32>
    %26 = vector.broadcast %13 : vector<24x1xf32> to vector<24x128xf32>
    %27 = arith.subf %7, %26 : vector<24x128xf32>
    %cst_15 = arith.constant 9.99999974E-6 : f32
    %28 = vector.broadcast %cst_15 : f32 to vector<24x1xf32>
    %29 = arith.addf %25, %28 : vector<24x1xf32>
    %30 = math.rsqrt %29 : vector<24x1xf32>
    %31 = vector.broadcast %30 : vector<24x1xf32> to vector<24x128xf32>
    %32 = arith.mulf %27, %31 : vector<24x128xf32>
    %33 = vector.broadcast %8 : vector<1x128xf32> to vector<24x128xf32>
    %34 = arith.mulf %32, %33 : vector<24x128xf32>
    %35 = vector.broadcast %9 : vector<1x128xf32> to vector<24x128xf32>
    %36 = arith.addf %34, %35 : vector<24x128xf32>
    %c0_16 = arith.constant 0 : index
    %c0_17 = arith.constant 0 : index
    %37 = vector.load %arg6[%c0_16, %c0_17] : memref<128x128xf32, #tpu.memory_space<vmem>>, vector<128x128xf32>
    %cst_18 = arith.constant dense<0.000000e+00> : vector<24x128xf32>
    %38 = tpu.matmul %36, %37, %cst_18 {dimension_numbers = #tpu.dot_dimension_numbers<[1], [0], [0], [1], [0, 0, 1, 1], [], []>} : vector<24x128xf32>, vector<128x128xf32>, vector<24x128xf32> -> vector<24x128xf32>
    %c0_19 = arith.constant 0 : index
    %c0_20 = arith.constant 0 : index
    %39 = vector.load %arg7[%c0_19, %c0_20] : memref<1x128xf32, #tpu.memory_space<vmem>>, vector<1x128xf32>
    %40 = vector.broadcast %39 : vector<1x128xf32> to vector<24x128xf32>
    %41 = arith.addf %38, %40 : vector<24x128xf32>
    %cst_21 = arith.constant 0.000000e+00 : f32
    %42 = vector.broadcast %cst_21 : f32 to vector<24x128xf32>
    %43 = arith.maximumf %41, %42 : vector<24x128xf32>
    %c0_22 = arith.constant 0 : index
    %c0_23 = arith.constant 0 : index
    %44 = vector.load %arg8[%c0_22, %c0_23] : memref<1x128xf32, #tpu.memory_space<vmem>>, vector<1x128xf32>
    %c0_24 = arith.constant 0 : index
    %c0_25 = arith.constant 0 : index
    %45 = vector.load %arg9[%c0_24, %c0_25] : memref<1x128xf32, #tpu.memory_space<vmem>>, vector<1x128xf32>
    %cst_26 = arith.constant dense<0.000000e+00> : vector<24xf32>
    %46 = vector.multi_reduction <add>, %43, %cst_26 [1] : vector<24x128xf32> to vector<24xf32>
    %47 = vector.shape_cast %46 : vector<24xf32> to vector<24x1xf32>
    %cst_27 = arith.constant 1.562500e-02 : f32
    %48 = vector.broadcast %cst_27 : f32 to vector<24x1xf32>
    %49 = arith.mulf %47, %48 : vector<24x1xf32>
    %50 = tpu.iota {dimensions = array<i32: 1>} : vector<24x128xi32>
    %c64_i32_28 = arith.constant 64 : i32
    %51 = vector.broadcast %c64_i32_28 : i32 to vector<24x128xi32>
    %52 = arith.cmpi slt, %50, %51 : vector<24x128xi32>
    %53 = vector.broadcast %49 : vector<24x1xf32> to vector<24x128xf32>
    %54 = arith.subf %43, %53 : vector<24x128xf32>
    %cst_29 = arith.constant 0.000000e+00 : f32
    %55 = vector.broadcast %cst_29 : f32 to vector<24x128xf32>
    %56 = arith.select %52, %54, %55 : vector<24x128xi1>, vector<24x128xf32>
    %57 = arith.mulf %56, %56 : vector<24x128xf32>
    %cst_30 = arith.constant dense<0.000000e+00> : vector<24xf32>
    %58 = vector.multi_reduction <add>, %57, %cst_30 [1] : vector<24x128xf32> to vector<24xf32>
    %59 = vector.shape_cast %58 : vector<24xf32> to vector<24x1xf32>
    %cst_31 = arith.constant 1.562500e-02 : f32
    %60 = vector.broadcast %cst_31 : f32 to vector<24x1xf32>
    %61 = arith.mulf %59, %60 : vector<24x1xf32>
    %62 = vector.broadcast %49 : vector<24x1xf32> to vector<24x128xf32>
    %63 = arith.subf %43, %62 : vector<24x128xf32>
    %cst_32 = arith.constant 9.99999974E-6 : f32
    %64 = vector.broadcast %cst_32 : f32 to vector<24x1xf32>
    %65 = arith.addf %61, %64 : vector<24x1xf32>
    %66 = math.rsqrt %65 : vector<24x1xf32>
    %67 = vector.broadcast %66 : vector<24x1xf32> to vector<24x128xf32>
    %68 = arith.mulf %63, %67 : vector<24x128xf32>
    %69 = vector.broadcast %44 : vector<1x128xf32> to vector<24x128xf32>
    %70 = arith.mulf %68, %69 : vector<24x128xf32>
    %71 = vector.broadcast %45 : vector<1x128xf32> to vector<24x128xf32>
    %72 = arith.addf %70, %71 : vector<24x128xf32>
    %c0_33 = arith.constant 0 : index
    %c0_34 = arith.constant 0 : index
    %73 = vector.load %arg10[%c0_33, %c0_34] : memref<128x128xf32, #tpu.memory_space<vmem>>, vector<128x128xf32>
    %cst_35 = arith.constant dense<0.000000e+00> : vector<24x128xf32>
    %74 = tpu.matmul %72, %73, %cst_35 {dimension_numbers = #tpu.dot_dimension_numbers<[1], [0], [0], [1], [0, 0, 1, 1], [], []>} : vector<24x128xf32>, vector<128x128xf32>, vector<24x128xf32> -> vector<24x128xf32>
    %c0_36 = arith.constant 0 : index
    %c0_37 = arith.constant 0 : index
    %75 = vector.load %arg11[%c0_36, %c0_37] : memref<1x128xf32, #tpu.memory_space<vmem>>, vector<1x128xf32>
    %76 = vector.broadcast %75 : vector<1x128xf32> to vector<24x128xf32>
    %77 = arith.addf %74, %76 : vector<24x128xf32>
    %c0_38 = arith.constant 0 : index
    %c0_39 = arith.constant 0 : index
    %78 = vector.load %arg12[%c0_38, %c0_39] : memref<24x128xf32, #tpu.memory_space<vmem>>, vector<24x128xf32>
    tpu.vector_store %arg12[%c0_38, %c0_39], %77 {strides = array<i32>} : memref<24x128xf32, #tpu.memory_space<vmem>>, vector<24x128xf32>,
    return
  }
  func.func @transform_0(%arg0: i32) -> (i32, i32) {
    %c0_i32 = arith.constant 0 : i32
    %c0_i32_0 = arith.constant 0 : i32
    return %arg0, %c0_i32 : i32, i32
  }
  func.func @transform_1(%arg0: i32) -> (i32, i32) {
    %c0_i32 = arith.constant 0 : i32
    %c0_i32_0 = arith.constant 0 : i32
    %c0_i32_1 = arith.constant 0 : i32
    return %c0_i32, %c0_i32_0 : i32, i32
  }
  func.func @transform_2(%arg0: i32) -> (i32, i32) {
    %c0_i32 = arith.constant 0 : i32
    %c0_i32_0 = arith.constant 0 : i32
    %c0_i32_1 = arith.constant 0 : i32
    return %c0_i32, %c0_i32_0 : i32, i32
  }
  func.func @transform_3(%arg0: i32) -> (i32, i32) {
    %c0_i32 = arith.constant 0 : i32
    %c0_i32_0 = arith.constant 0 : i32
    %c0_i32_1 = arith.constant 0 : i32
    return %c0_i32, %c0_i32_0 : i32, i32
  }
  func.func @transform_4(%arg0: i32) -> (i32, i32) {
    %c0_i32 = arith.constant 0 : i32
    %c0_i32_0 = arith.constant 0 : i32
    %c0_i32_1 = arith.constant 0 : i32
    return %c0_i32, %c0_i32_0 : i32, i32
  }
  func.func @transform_5(%arg0: i32) -> (i32, i32) {
    %c0_i32 = arith.constant 0 : i32
    %c0_i32_0 = arith.constant 0 : i32
    %c0_i32_1 = arith.constant 0 : i32
    return %c0_i32, %c0_i32_0 : i32, i32
  }
  func.func @transform_6(%arg0: i32) -> (i32, i32) {
    %c0_i32 = arith.constant 0 : i32
    %c0_i32_0 = arith.constant 0 : i32
    %c0_i32_1 = arith.constant 0 : i32
    return %c0_i32, %c0_i32_0 : i32, i32
  }
  func.func @transform_7(%arg0: i32) -> (i32, i32) {
    %c0_i32 = arith.constant 0 : i32
    %c0_i32_0 = arith.constant 0 : i32
    %c0_i32_1 = arith.constant 0 : i32
    return %c0_i32, %c0_i32_0 : i32, i32
  }
  func.func @transform_8(%arg0: i32) -> (i32, i32) {
    %c0_i32 = arith.constant 0 : i32
    %c0_i32_0 = arith.constant 0 : i32
    %c0_i32_1 = arith.constant 0 : i32
    return %c0_i32, %c0_i32_0 : i32, i32
  }
  func.func @transform_9(%arg0: i32) -> (i32, i32) {
    %c0_i32 = arith.constant 0 : i32
    %c0_i32_0 = arith.constant 0 : i32
    %c0_i32_1 = arith.constant 0 : i32
    return %c0_i32, %c0_i32_0 : i32, i32
  }
  func.func @transform_10(%arg0: i32) -> (i32, i32) {
    %c0_i32 = arith.constant 0 : i32
    %c0_i32_0 = arith.constant 0 : i32
    %c0_i32_1 = arith.constant 0 : i32
    return %c0_i32, %c0_i32_0 : i32, i32
  }
  func.func @transform_11(%arg0: i32) -> (i32, i32) {
    %c0_i32 = arith.constant 0 : i32
    %c0_i32_0 = arith.constant 0 : i32
    return %arg0, %c0_i32 : i32, i32
  }
}

</mosaic_0001>

<llo_original>
// kernel: tpu_custom_call.1
$region0: #{tpu_custom_call.1}
  #allocation0 [shape = 'u32[]', space=smem, size = 0x4, offset = 0x4, fixed_abs, tag = 'smem constant byte address 0x4 - core index']
  #allocation1 [shape = 'u32[144,128]{1,0:T(1,128)}', space=vmem, size = 0x12000, scoped, tag = 'internal scratch']
  %s0 = inlined_call_operand.hbm [shape: f32[24,32], index: 0, kind: input, shape index: {}]
  %s1 = inlined_call_operand.hbm [shape: f32[32,128], index: 1, kind: input, shape index: {}]
  %s2 = inlined_call_operand.vmem [shape: f32[1,128], index: 2, kind: input, shape index: {}]
  %s3 = inlined_call_operand.vmem [shape: f32[1,128], index: 3, kind: input, shape index: {}]
  %s4 = inlined_call_operand.vmem [shape: f32[1,128], index: 4, kind: input, shape index: {}]
  %s5 = inlined_call_operand.hbm [shape: f32[128,128], index: 5, kind: input, shape index: {}]
  %s6 = inlined_call_operand.vmem [shape: f32[1,128], index: 6, kind: input, shape index: {}]
  %s7 = inlined_call_operand.vmem [shape: f32[1,128], index: 7, kind: input, shape index: {}]
  %s8 = inlined_call_operand.vmem [shape: f32[1,128], index: 8, kind: input, shape index: {}]
  %s9 = inlined_call_operand.hbm [shape: f32[128,128], index: 9, kind: input, shape index: {}]
  %s10 = inlined_call_operand.vmem [shape: f32[1,128], index: 10, kind: input, shape index: {}]
  %s11 = inlined_call_operand.hbm [shape: f32[24,128], index: 11, kind: output, shape index: {}]
  %s12 = sld [smem:[#allocation0]]
  $region70: #{tpu_custom_call.1} parent=0
    _
  %s14 = ssub.s32 1, %s12
  %s15 = scalar_select 0, %s14, %s12
  $region1: #{tpu_custom_call.1} parent=0
    #allocation2 [shape = 'u8[12288]{0}', space=vmem, size = 0x3000, scoped, tag = 'input window, operand 0, single buffered']
    #allocation3 [shape = 's32[1]{0}', space=sflag, size = 0x4, scoped, tag = 'scoped memory for tpu_custom_call.1']
    #allocation4 [shape = 's32[1]{0}', space=sflag, size = 0x4, scoped, tag = 'scoped memory for tpu_custom_call.1']
    #allocation5 [shape = 'u8[16384]{0}', space=vmem, size = 0x4000, scoped, tag = 'input window, operand 1, single buffered']
    #allocation6 [shape = 's32[1]{0}', space=sflag, size = 0x4, scoped, tag = 'scoped memory for tpu_custom_call.1']
    #allocation7 [shape = 'u8[65536]{0}', space=vmem, size = 0x10000, scoped, tag = 'input window, operand 5, single buffered']
    #allocation8 [shape = 'u8[65536]{0}', space=vmem, size = 0x10000, scoped, tag = 'input window, operand 9, single buffered']
    #allocation9 [shape = 's32[1]{0}', space=sflag, size = 0x4, scoped, tag = 'scoped memory for tpu_custom_call.1']
    #allocation10 [shape = 'u8[12288]{0}', space=vmem, size = 0x3000, scoped, tag = 'output window, operand 0, single buffered']
    %16 = vsyncpa [#allocation3], 0
    %17 = vsyncpa [#allocation6], 0
    %18 = vsyncpa [#allocation9], 0
    %19 = vsyncpa [#allocation4], 0
    // Predicated region
    $region2: #{tpu_custom_call.1} parent=1 // pred_check
      _
    $region3: #{tpu_custom_call.1} parent=1 // pred_check_branch
      %21 = sbr.rel (0) target = $region5
    $region4: #{tpu_custom_call.1} parent=1 // pred_region
      %s23 = ssub.s32 384, 384
      %24 = vsyncadd [#allocation3], %s23
      %s25 = sshll.u32 [#allocation2], 4
      %s26 = int_to_ptr.vmem [resolvable:$true] %s25
      %31 = dma.hbm_to_vmem [thread:$0]  %s0, 384, %s26, [#allocation3], 128, 128, 8
    $region5: #{tpu_custom_call.1} parent=1 // pred_fallthru
      _
    // Predicated region
    $region6: #{tpu_custom_call.1} parent=1 // pred_check
      _
    $region7: #{tpu_custom_call.1} parent=1 // pred_check_branch
      %33 = sbr.rel (0) target = $region9
    $region8: #{tpu_custom_call.1} parent=1 // pred_region
      %s35 = ssub.s32 512, 512
      %36 = vsyncadd [#allocation6], %s35
      %s37 = sshll.u32 [#allocation5], 4
      %s38 = int_to_ptr.vmem [resolvable:$true] %s37
      %43 = dma.hbm_to_vmem [thread:$0]  %s1, 512, %s38, [#allocation6], 128, 128, 8
    $region9: #{tpu_custom_call.1} parent=1 // pred_fallthru
      _
    // Predicated region
    $region10: #{tpu_custom_call.1} parent=1 // pred_check
      _
    $region11: #{tpu_custom_call.1} parent=1 // pred_check_branch
      %45 = sbr.rel (0) target = $region13
    $region12: #{tpu_custom_call.1} parent=1 // pred_region
      _
    $region13: #{tpu_custom_call.1} parent=1 // pred_fallthru
      _
    // Predicated region
    $region14: #{tpu_custom_call.1} parent=1 // pred_check
      _
    $region15: #{tpu_custom_call.1} parent=1 // pred_check_branch
      %47 = sbr.rel (0) target = $region17
    $region16: #{tpu_custom_call.1} parent=1 // pred_region
      _
    $region17: #{tpu_custom_call.1} parent=1 // pred_fallthru
      _
    // Predicated region
    $region18: #{tpu_custom_call.1} parent=1 // pred_check
      _
    $region19: #{tpu_custom_call.1} parent=1 // pred_check_branch
      %49 = sbr.rel (0) target = $region21
    $region20: #{tpu_custom_call.1} parent=1 // pred_region
      _
    $region21: #{tpu_custom_call.1} parent=1 // pred_fallthru
      _
    // Predicated region
    $region22: #{tpu_custom_call.1} parent=1 // pred_check
      _
    $region23: #{tpu_custom_call.1} parent=1 // pred_check_branch
      %51 = sbr.rel (0) target = $region25
    $region24: #{tpu_custom_call.1} parent=1 // pred_region
      %s53 = ssub.s32 2048, 2048
      %54 = vsyncadd [#allocation6], %s53
      %s55 = sshll.u32 [#allocation7], 4
      %s56 = int_to_ptr.vmem [resolvable:$true] %s55
      %61 = dma.hbm_to_vmem [thread:$0]  %s5, 2048, %s56, [#allocation6], 128, 128, 8
    $region25: #{tpu_custom_call.1} parent=1 // pred_fallthru
      _
    // Predicated region
    $region26: #{tpu_custom_call.1} parent=1 // pred_check
      _
    $region27: #{tpu_custom_call.1} parent=1 // pred_check_branch
      %63 = sbr.rel (0) target = $region29
    $region28: #{tpu_custom_call.1} parent=1 // pred_region
      _
    $region29: #{tpu_custom_call.1} parent=1 // pred_fallthru
      _
    // Predicated region
    $region30: #{tpu_custom_call.1} parent=1 // pred_check
      _
    $region31: #{tpu_custom_call.1} parent=1 // pred_check_branch
      %65 = sbr.rel (0) target = $region33
    $region32: #{tpu_custom_call.1} parent=1 // pred_region
      _
    $region33: #{tpu_custom_call.1} parent=1 // pred_fallthru
      _
    // Predicated region
    $region34: #{tpu_custom_call.1} parent=1 // pred_check
      _
    $region35: #{tpu_custom_call.1} parent=1 // pred_check_branch
      %67 = sbr.rel (0) target = $region37
    $region36: #{tpu_custom_call.1} parent=1 // pred_region
      _
    $region37: #{tpu_custom_call.1} parent=1 // pred_fallthru
      _
    // Predicated region
    $region38: #{tpu_custom_call.1} parent=1 // pred_check
      _
    $region39: #{tpu_custom_call.1} parent=1 // pred_check_branch
      %69 = sbr.rel (0) target = $region41
    $region40: #{tpu_custom_call.1} parent=1 // pred_region
      %s71 = ssub.s32 2048, 2048
      %72 = vsyncadd [#allocation9], %s71
      %s73 = sshll.u32 [#allocation8], 4
      %s74 = int_to_ptr.vmem [resolvable:$true] %s73
      %79 = dma.hbm_to_vmem [thread:$0]  %s9, 2048, %s74, [#allocation9], 128, 128, 8
    $region41: #{tpu_custom_call.1} parent=1 // pred_fallthru
      _
    // Predicated region
    $region42: #{tpu_custom_call.1} parent=1 // pred_check
      _
    $region43: #{tpu_custom_call.1} parent=1 // pred_check_branch
      %81 = sbr.rel (0) target = $region45
    $region44: #{tpu_custom_call.1} parent=1 // pred_region
      _
    $region45: #{tpu_custom_call.1} parent=1 // pred_fallthru
      _
    // Predicated region
    $region46: #{tpu_custom_call.1} parent=1 // pred_check
      _
    $region47: #{tpu_custom_call.1} parent=1 // pred_check_branch
      %83 = sbr.rel (0) target = $region49
    $region48: #{tpu_custom_call.1} parent=1 // pred_region
      %84 = dma.done [#allocation3], 384
    $region49: #{tpu_custom_call.1} parent=1 // pred_fallthru
      _
    // Predicated region
    $region50: #{tpu_custom_call.1} parent=1 // pred_check
      _
    $region51: #{tpu_custom_call.1} parent=1 // pred_check_branch
      %86 = sbr.rel (0) target = $region53
    $region52: #{tpu_custom_call.1} parent=1 // pred_region
      %87 = dma.done [#allocation6], 512
    $region53: #{tpu_custom_call.1} parent=1 // pred_fallthru
      _
    // Predicated region
    $region54: #{tpu_custom_call.1} parent=1 // pred_check
      _
    $region55: #{tpu_custom_call.1} parent=1 // pred_check_branch
      %89 = sbr.rel (0) target = $region57
    $region56: #{tpu_custom_call.1} parent=1 // pred_region
      %90 = dma.done [#allocation6], 2048
    $region57: #{tpu_custom_call.1} parent=1 // pred_fallthru
      _
    // Predicated region
    $region58: #{tpu_custom_call.1} parent=1 // pred_check
      _
    $region59: #{tpu_custom_call.1} parent=1 // pred_check_branch
      %92 = sbr.rel (0) target = $region61
    $region60: #{tpu_custom_call.1} parent=1 // pred_region
      %93 = dma.done [#allocation9], 2048
    $region61: #{tpu_custom_call.1} parent=1 // pred_fallthru
      _
    %v94 = vld [vmem:[#allocation2] sm:$0xff]
    %v95 = vld [vmem:[#allocation2 + $0x8] sm:$0xff]
    %v96 = vld [vmem:[#allocation2 + $0x10] sm:$0xff]
    %v97 = vld [vmem:[#allocation5] sm:$0xff]
    %v98 = vld [vmem:[#allocation5 + $0x8] sm:$0xff]
    %v99 = vld [vmem:[#allocation5 + $0x10] sm:$0xff]
    %v100 = vld [vmem:[#allocation5 + $0x18] sm:$0xff]
    %v101 = vld [vmem:[%s2] sm:$0x1]
    %v103 = vlaneseq
    %v104 = vshrl.u32 %v103, 7
    %v105 = vsub.s32 0, %v104
    %v106 = vrot.slane %v101, %v105
    %vm108 = vcmask 261120
    %v110 = vsel %vm108, %v94, 0
    %v113 = vsel %vm108, %v95, 0
    %v116 = vsel %vm108, %v96, 0
    %118 = vmatprep.subr.mxu0 0.0
    %119 = vmatpush1.msra.mxu0 0.0
    %120 = vmatprep.subr.mxu0 0.0
    %121 = vmatpush1.msra.mxu0 0.0
    %122 = vmatprep.subr.mxu0 0.0
    %123 = vmatpush1.msra.mxu0 0.0
    %124 = vmatprep.subr.mxu0 0.0
    %125 = vmatpush1.msra.mxu0 0.0
    %126 = vmatprep.subr.mxu0 0.0
    %127 = vmatpush1.msra.mxu0 0.0
    %128 = vmatprep.subr.mxu0 0.0
    %129 = vmatpush1.msra.mxu0 0.0
    %130 = vmatprep.subr.mxu0 0.0
    %131 = vmatpush1.msra.mxu0 0.0
    %132 = vmatprep.subr.mxu0 0.0
    %133 = vmatpush1.msra.mxu0 0.0
    %134 = vmatprep.subr.mxu0 0.0
    %135 = vmatpush1.msra.mxu0 0.0
    %136 = vmatprep.subr.mxu0 0.0
    %137 = vmatpush1.msra.mxu0 0.0
    %138 = vmatprep.subr.mxu0 0.0
    %139 = vmatpush1.msra.mxu0 0.0
    %140 = vmatprep.subr.mxu0 0.0
    %141 = vmatpush1.msra.mxu0 0.0
    %142 = vmatprep.subr.mxu0 0.0
    %143 = vmatpush1.msra.mxu0 %v100
    %144 = vmatprep.subr.mxu0 0.0
    %145 = vmatpush1.msra.mxu0 %v99
    %146 = vmatprep.subr.mxu0 0.0
    %147 = vmatpush1.msra.mxu0 %v98
    %148 = vmatprep.subr.mxu0 0.0
    %149 = vmatpush1.msra.mxu0 %v97
    %150 = vmatprep.subr.mxu0 0.0
    %151 = vmatpush2.msra.mxu0 0.0
    %152 = vmatprep.subr.mxu0 0.0
    %153 = vmatpush2.msra.mxu0 0.0
    %154 = vmatprep.subr.mxu0 0.0
    %155 = vmatpush2.msra.mxu0 0.0
    %156 = vmatprep.subr.mxu0 0.0
    %157 = vmatpush2.msra.mxu0 0.0
    %158 = vmatprep.subr.mxu0 0.0
    %159 = vmatpush2.msra.mxu0 0.0
    %160 = vmatprep.subr.mxu0 0.0
    %161 = vmatpush2.msra.mxu0 0.0
    %162 = vmatprep.subr.mxu0 0.0
    %163 = vmatpush2.msra.mxu0 0.0
    %164 = vmatprep.subr.mxu0 0.0
    %165 = vmatpush2.msra.mxu0 0.0
    %166 = vmatprep.subr.mxu0 0.0
    %167 = vmatpush2.msra.mxu0 0.0
    %168 = vmatprep.subr.mxu0 0.0
    %169 = vmatpush2.msra.mxu0 0.0
    %170 = vmatprep.subr.mxu0 0.0
    %171 = vmatpush2.msra.mxu0 0.0
    %172 = vmatprep.subr.mxu0 0.0
    %173 = vmatpush2.msra.mxu0 0.0
    %174 = vmatprep.subr.mxu0 0.0
    %175 = vmatpush2.msra.mxu0 0.0
    %176 = vmatprep.subr.mxu0 0.0
    %177 = vmatpush2.msra.mxu0 0.0
    %178 = vmatprep.subr.mxu0 0.0
    %179 = vmatpush2.msra.mxu0 0.0
    %180 = vmatprep.subr.mxu0 0.0
    %181 = vmatpush2.msra.mxu0 0.0
    %182 = vmatprep.mubr.f32.mxu0 0.0
    %183 = vmatmul.mubr.f32.gmra.mxu0 %v110
    %v184 = vpop.f32.mrf.mxu0
    %v185 = vadd.f32 %v106, %v184
    %v186 = vpop.f32.mrf.mxu0
    %187 = vmatprep.mubr.f32.mxu0 0.0
    %188 = vmatmul.mubr.f32.gmra.mxu0 %v113
    %v189 = vpop.f32.mrf.mxu0
    %v190 = vadd.f32 %v106, %v189
    %v191 = vpop.f32.mrf.mxu0
    %192 = vmatprep.mubr.f32.mxu0 0.0
    %193 = vmatmul.mubr.f32.gmra.mxu0 %v116
    %v194 = vpop.f32.mrf.mxu0
    %v195 = vadd.f32 %v106, %v194
    %v196 = vpop.f32.mrf.mxu0
    %197 = vdwg.mxu0
    %v198 = vmax.f32 %v185, 0.0
    %v199 = vmax.f32 %v190, 0.0
    %v200 = vmax.f32 %v195, 0.0
    %v201 = vld [vmem:[%s3] sm:$0x1]
    %v202 = vld [vmem:[%s4] sm:$0x1]
    %203 = vadd.xlane.f32.xlu0 %v198
    %v204 = vpop.xlane.xlu0 %203
    %205 = vadd.xlane.f32.xlu0 %v199
    %v206 = vpop.xlane.xlu0 %205
    %207 = vadd.xlane.f32.xlu0 %v200
    %v208 = vpop.xlane.xlu0 %207
    %v209 = vmul.f32 %v204, 0.015625
    %v210 = vmul.f32 %v206, 0.015625
    %v211 = vmul.f32 %v208, 0.015625
    %v212 = vlaneseq
    %v213 = vand.u32 %v212, 127
    %vm214 = vcmp.lt.s32.totalorder %v213, 64
    %v215 = vsub.f32 %v198, %v209
    %v216 = vsub.f32 %v199, %v210
    %v217 = vsub.f32 %v200, %v211
    %v218 = vsel %vm214, %v215, 0.0
    %v219 = vsel %vm214, %v216, 0.0
    %v220 = vsel %vm214, %v217, 0.0
    %v221 = vmul.f32 %v218, %v218
    %v222 = vmul.f32 %v219, %v219
    %v223 = vmul.f32 %v220, %v220
    %224 = vadd.xlane.f32.xlu0 %v221
    %v225 = vpop.xlane.xlu0 %224
    %226 = vadd.xlane.f32.xlu0 %v222
    %v227 = vpop.xlane.xlu0 %226
    %228 = vadd.xlane.f32.xlu0 %v223
    %v229 = vpop.xlane.xlu0 %228
    %v230 = vmul.f32 %v225, 0.015625
    %v231 = vmul.f32 %v227, 0.015625
    %v232 = vmul.f32 %v229, 0.015625
    %v233 = vadd.f32 %v230, 1e-05
    %v234 = vadd.f32 %v231, 1e-05
    %v235 = vadd.f32 %v232, 1e-05
    %v236 = vrsqrt.pop %v233
    %v237 = vrsqrt.pop %v234
    %v238 = vrsqrt.pop %v235
    %v239 = vmul.f32 %v215, %v236
    %v240 = vmul.f32 %v216, %v237
    %v241 = vmul.f32 %v217, %v238
    %v243 = vlaneseq
    %v244 = vshrl.u32 %v243, 7
    %v245 = vsub.s32 0, %v244
    %v246 = vrot.slane %v201, %v245
    %v248 = vmul.f32 %v239, %v246
    %v249 = vmul.f32 %v240, %v246
    %v250 = vmul.f32 %v241, %v246
    %v252 = vlaneseq
    %v253 = vshrl.u32 %v252, 7
    %v254 = vsub.s32 0, %v253
    %v255 = vrot.slane %v202, %v254
    %v257 = vadd.f32 %v248, %v255
    %v258 = vadd.f32 %v249, %v255
    %v259 = vadd.f32 %v250, %v255
    %v260 = vld [vmem:[#allocation7] sm:$0xff]
    %v261 = vld [vmem:[#allocation7 + $0x8] sm:$0xff]
    %v262 = vld [vmem:[#allocation7 + $0x10] sm:$0xff]
    %v263 = vld [vmem:[#allocation7 + $0x18] sm:$0xff]
    %v264 = vld [vmem:[#allocation7 + $0x20] sm:$0xff]
    %v265 = vld [vmem:[#allocation7 + $0x28] sm:$0xff]
    %v266 = vld [vmem:[#allocation7 + $0x30] sm:$0xff]
    %v267 = vld [vmem:[#allocation7 + $0x38] sm:$0xff]
    %v268 = vld [vmem:[#allocation7 + $0x40] sm:$0xff]
    %v269 = vld [vmem:[#allocation7 + $0x48] sm:$0xff]
    %v270 = vld [vmem:[#allocation7 + $0x50] sm:$0xff]
    %v271 = vld [vmem:[#allocation7 + $0x58] sm:$0xff]
    %v272 = vld [vmem:[#allocation7 + $0x60] sm:$0xff]
    %v273 = vld [vmem:[#allocation7 + $0x68] sm:$0xff]
    %v274 = vld [vmem:[#allocation7 + $0x70] sm:$0xff]
    %v275 = vld [vmem:[#allocation7 + $0x78] sm:$0xff]
    %v276 = vld [vmem:[%s6] sm:$0x1]
    %v278 = vlaneseq
    %v279 = vshrl.u32 %v278, 7
    %v280 = vsub.s32 0, %v279
    %v281 = vrot.slane %v276, %v280
    %283 = vmatprep.subr.mxu0 0.0
    %284 = vmatpush1.msra.mxu0 %v275
    %285 = vmatprep.subr.mxu0 0.0
    %286 = vmatpush1.msra.mxu0 %v274
    %287 = vmatprep.subr.mxu0 0.0
    %288 = vmatpush1.msra.mxu0 %v273
    %289 = vmatprep.subr.mxu0 0.0
    %290 = vmatpush1.msra.mxu0 %v272
    %291 = vmatprep.subr.mxu0 0.0
    %292 = vmatpush1.msra.mxu0 %v271
    %293 = vmatprep.subr.mxu0 0.0
    %294 = vmatpush1.msra.mxu0 %v270
    %295 = vmatprep.subr.mxu0 0.0
    %296 = vmatpush1.msra.mxu0 %v269
    %297 = vmatprep.subr.mxu0 0.0
    %298 = vmatpush1.msra.mxu0 %v268
    %299 = vmatprep.subr.mxu0 0.0
    %300 = vmatpush1.msra.mxu0 %v267
    %301 = vmatprep.subr.mxu0 0.0
    %302 = vmatpush1.msra.mxu0 %v266
    %303 = vmatprep.subr.mxu0 0.0
    %304 = vmatpush1.msra.mxu0 %v265
    %305 = vmatprep.subr.mxu0 0.0
    %306 = vmatpush1.msra.mxu0 %v264
    %307 = vmatprep.subr.mxu0 0.0
    %308 = vmatpush1.msra.mxu0 %v263
    %309 = vmatprep.subr.mxu0 0.0
    %310 = vmatpush1.msra.mxu0 %v262
    %311 = vmatprep.subr.mxu0 0.0
    %312 = vmatpush1.msra.mxu0 %v261
    %313 = vmatprep.subr.mxu0 0.0
    %314 = vmatpush1.msra.mxu0 %v260
    %315 = vmatprep.subr.mxu0 0.0
    %316 = vmatpush2.msra.mxu0 0.0
    %317 = vmatprep.subr.mxu0 0.0
    %318 = vmatpush2.msra.mxu0 0.0
    %319 = vmatprep.subr.mxu0 0.0
    %320 = vmatpush2.msra.mxu0 0.0
    %321 = vmatprep.subr.mxu0 0.0
    %322 = vmatpush2.msra.mxu0 0.0
    %323 = vmatprep.subr.mxu0 0.0
    %324 = vmatpush2.msra.mxu0 0.0
    %325 = vmatprep.subr.mxu0 0.0
    %326 = vmatpush2.msra.mxu0 0.0
    %327 = vmatprep.subr.mxu0 0.0
    %328 = vmatpush2.msra.mxu0 0.0
    %329 = vmatprep.subr.mxu0 0.0
    %330 = vmatpush2.msra.mxu0 0.0
    %331 = vmatprep.subr.mxu0 0.0
    %332 = vmatpush2.msra.mxu0 0.0
    %333 = vmatprep.subr.mxu0 0.0
    %334 = vmatpush2.msra.mxu0 0.0
    %335 = vmatprep.subr.mxu0 0.0
    %336 = vmatpush2.msra.mxu0 0.0
    %337 = vmatprep.subr.mxu0 0.0
    %338 = vmatpush2.msra.mxu0 0.0
    %339 = vmatprep.subr.mxu0 0.0
    %340 = vmatpush2.msra.mxu0 0.0
    %341 = vmatprep.subr.mxu0 0.0
    %342 = vmatpush2.msra.mxu0 0.0
    %343 = vmatprep.subr.mxu0 0.0
    %344 = vmatpush2.msra.mxu0 0.0
    %345 = vmatprep.subr.mxu0 0.0
    %346 = vmatpush2.msra.mxu0 0.0
    %347 = vmatprep.mubr.f32.mxu0 0.0
    %348 = vmatmul.mubr.f32.gmra.mxu0 %v257
    %v349 = vpop.f32.mrf.mxu0
    %v350 = vadd.f32 %v281, %v349
    %v351 = vpop.f32.mrf.mxu0
    %352 = vmatprep.mubr.f32.mxu0 0.0
    %353 = vmatmul.mubr.f32.gmra.mxu0 %v258
    %v354 = vpop.f32.mrf.mxu0
    %v355 = vadd.f32 %v281, %v354
    %v356 = vpop.f32.mrf.mxu0
    %357 = vmatprep.mubr.f32.mxu0 0.0
    %358 = vmatmul.mubr.f32.gmra.mxu0 %v259
    %v359 = vpop.f32.mrf.mxu0
    %v360 = vadd.f32 %v281, %v359
    %v361 = vpop.f32.mrf.mxu0
    %362 = vdwg.mxu0
    %v363 = vmax.f32 %v350, 0.0
    %v364 = vmax.f32 %v355, 0.0
    %v365 = vmax.f32 %v360, 0.0
    %v366 = vld [vmem:[%s7] sm:$0x1]
    %v367 = vld [vmem:[%s8] sm:$0x1]
    %368 = vadd.xlane.f32.xlu0 %v363
    %v369 = vpop.xlane.xlu0 %368
    %370 = vadd.xlane.f32.xlu0 %v364
    %v371 = vpop.xlane.xlu0 %370
    %372 = vadd.xlane.f32.xlu0 %v365
    %v373 = vpop.xlane.xlu0 %372
    %v374 = vmul.f32 %v369, 0.015625
    %v375 = vmul.f32 %v371, 0.015625
    %v376 = vmul.f32 %v373, 0.015625
    %v377 = vsub.f32 %v363, %v374
    %v378 = vsub.f32 %v364, %v375
    %v379 = vsub.f32 %v365, %v376
    %v380 = vsel %vm214, %v377, 0.0
    %v381 = vsel %vm214, %v378, 0.0
    %v382 = vsel %vm214, %v379, 0.0
    %v383 = vmul.f32 %v380, %v380
    %v384 = vmul.f32 %v381, %v381
    %v385 = vmul.f32 %v382, %v382
    %386 = vadd.xlane.f32.xlu0 %v383
    %v387 = vpop.xlane.xlu0 %386
    %388 = vadd.xlane.f32.xlu0 %v384
    %v389 = vpop.xlane.xlu0 %388
    %390 = vadd.xlane.f32.xlu0 %v385
    %v391 = vpop.xlane.xlu0 %390
    %v392 = vmul.f32 %v387, 0.015625
    %v393 = vmul.f32 %v389, 0.015625
    %v394 = vmul.f32 %v391, 0.015625
    %v395 = vadd.f32 %v392, 1e-05
    %v396 = vadd.f32 %v393, 1e-05
    %v397 = vadd.f32 %v394, 1e-05
    %v398 = vrsqrt.pop %v395
    %v399 = vrsqrt.pop %v396
    %v400 = vrsqrt.pop %v397
    %v401 = vmul.f32 %v377, %v398
    %v402 = vmul.f32 %v378, %v399
    %v403 = vmul.f32 %v379, %v400
    %v405 = vlaneseq
    %v406 = vshrl.u32 %v405, 7
    %v407 = vsub.s32 0, %v406
    %v408 = vrot.slane %v366, %v407
    %v410 = vmul.f32 %v401, %v408
    %v411 = vmul.f32 %v402, %v408
    %v412 = vmul.f32 %v403, %v408
    %v414 = vlaneseq
    %v415 = vshrl.u32 %v414, 7
    %v416 = vsub.s32 0, %v415
    %v417 = vrot.slane %v367, %v416
    %v419 = vadd.f32 %v410, %v417
    %v420 = vadd.f32 %v411, %v417
    %v421 = vadd.f32 %v412, %v417
    %v422 = vld [vmem:[#allocation8] sm:$0xff]
    %v423 = vld [vmem:[#allocation8 + $0x8] sm:$0xff]
    %v424 = vld [vmem:[#allocation8 + $0x10] sm:$0xff]
    %v425 = vld [vmem:[#allocation8 + $0x18] sm:$0xff]
    %v426 = vld [vmem:[#allocation8 + $0x20] sm:$0xff]
    %v427 = vld [vmem:[#allocation8 + $0x28] sm:$0xff]
    %v428 = vld [vmem:[#allocation8 + $0x30] sm:$0xff]
    %v429 = vld [vmem:[#allocation8 + $0x38] sm:$0xff]
    %v430 = vld [vmem:[#allocation8 + $0x40] sm:$0xff]
    %v431 = vld [vmem:[#allocation8 + $0x48] sm:$0xff]
    %v432 = vld [vmem:[#allocation8 + $0x50] sm:$0xff]
    %v433 = vld [vmem:[#allocation8 + $0x58] sm:$0xff]
    %v434 = vld [vmem:[#allocation8 + $0x60] sm:$0xff]
    %v435 = vld [vmem:[#allocation8 + $0x68] sm:$0xff]
    %v436 = vld [vmem:[#allocation8 + $0x70] sm:$0xff]
    %v437 = vld [vmem:[#allocation8 + $0x78] sm:$0xff]
    %v438 = vld [vmem:[%s10] sm:$0x1]
    %v440 = vlaneseq
    %v441 = vshrl.u32 %v440, 7
    %v442 = vsub.s32 0, %v441
    %v443 = vrot.slane %v438, %v442
    %445 = vmatprep.subr.mxu0 0.0
    %446 = vmatpush1.msra.mxu0 %v437
    %447 = vmatprep.subr.mxu0 0.0
    %448 = vmatpush1.msra.mxu0 %v436
    %449 = vmatprep.subr.mxu0 0.0
    %450 = vmatpush1.msra.mxu0 %v435
    %451 = vmatprep.subr.mxu0 0.0
    %452 = vmatpush1.msra.mxu0 %v434
    %453 = vmatprep.subr.mxu0 0.0
    %454 = vmatpush1.msra.mxu0 %v433
    %455 = vmatprep.subr.mxu0 0.0
    %456 = vmatpush1.msra.mxu0 %v432
    %457 = vmatprep.subr.mxu0 0.0
    %458 = vmatpush1.msra.mxu0 %v431
    %459 = vmatprep.subr.mxu0 0.0
    %460 = vmatpush1.msra.mxu0 %v430
    %461 = vmatprep.subr.mxu0 0.0
    %462 = vmatpush1.msra.mxu0 %v429
    %463 = vmatprep.subr.mxu0 0.0
    %464 = vmatpush1.msra.mxu0 %v428
    %465 = vmatprep.subr.mxu0 0.0
    %466 = vmatpush1.msra.mxu0 %v427
    %467 = vmatprep.subr.mxu0 0.0
    %468 = vmatpush1.msra.mxu0 %v426
    %469 = vmatprep.subr.mxu0 0.0
    %470 = vmatpush1.msra.mxu0 %v425
    %471 = vmatprep.subr.mxu0 0.0
    %472 = vmatpush1.msra.mxu0 %v424
    %473 = vmatprep.subr.mxu0 0.0
    %474 = vmatpush1.msra.mxu0 %v423
    %475 = vmatprep.subr.mxu0 0.0
    %476 = vmatpush1.msra.mxu0 %v422
    %477 = vmatprep.subr.mxu0 0.0
    %478 = vmatpush2.msra.mxu0 0.0
    %479 = vmatprep.subr.mxu0 0.0
    %480 = vmatpush2.msra.mxu0 0.0
    %481 = vmatprep.subr.mxu0 0.0
    %482 = vmatpush2.msra.mxu0 0.0
    %483 = vmatprep.subr.mxu0 0.0
    %484 = vmatpush2.msra.mxu0 0.0
    %485 = vmatprep.subr.mxu0 0.0
    %486 = vmatpush2.msra.mxu0 0.0
    %487 = vmatprep.subr.mxu0 0.0
    %488 = vmatpush2.msra.mxu0 0.0
    %489 = vmatprep.subr.mxu0 0.0
    %490 = vmatpush2.msra.mxu0 0.0
    %491 = vmatprep.subr.mxu0 0.0
    %492 = vmatpush2.msra.mxu0 0.0
    %493 = vmatprep.subr.mxu0 0.0
    %494 = vmatpush2.msra.mxu0 0.0
    %495 = vmatprep.subr.mxu0 0.0
    %496 = vmatpush2.msra.mxu0 0.0
    %497 = vmatprep.subr.mxu0 0.0
    %498 = vmatpush2.msra.mxu0 0.0
    %499 = vmatprep.subr.mxu0 0.0
    %500 = vmatpush2.msra.mxu0 0.0
    %501 = vmatprep.subr.mxu0 0.0
    %502 = vmatpush2.msra.mxu0 0.0
    %503 = vmatprep.subr.mxu0 0.0
    %504 = vmatpush2.msra.mxu0 0.0
    %505 = vmatprep.subr.mxu0 0.0
    %506 = vmatpush2.msra.mxu0 0.0
    %507 = vmatprep.subr.mxu0 0.0
    %508 = vmatpush2.msra.mxu0 0.0
    %509 = vmatprep.mubr.f32.mxu0 0.0
    %510 = vmatmul.mubr.f32.gmra.mxu0 %v419
    %v511 = vpop.f32.mrf.mxu0
    %v512 = vadd.f32 %v443, %v511
    %v513 = vpop.f32.mrf.mxu0
    %514 = vmatprep.mubr.f32.mxu0 0.0
    %515 = vmatmul.mubr.f32.gmra.mxu0 %v420
    %v516 = vpop.f32.mrf.mxu0
    %v517 = vadd.f32 %v443, %v516
    %v518 = vpop.f32.mrf.mxu0
    %519 = vmatprep.mubr.f32.mxu0 0.0
    %520 = vmatmul.mubr.f32.gmra.mxu0 %v421
    %v521 = vpop.f32.mrf.mxu0
    %v522 = vadd.f32 %v443, %v521
    %v523 = vpop.f32.mrf.mxu0
    %524 = vdwg.mxu0
    %525 = vst [vmem:[#allocation10] sm:$0xff] %v512
    %526 = vst [vmem:[#allocation10 + $0x8] sm:$0xff] %v517
    %527 = vst [vmem:[#allocation10 + $0x10] sm:$0xff] %v522
    // Predicated region
    $region62: #{tpu_custom_call.1} parent=1 // pred_check
      _
    $region63: #{tpu_custom_call.1} parent=1 // pred_check_branch
      %529 = sbr.rel (0) target = $region65
    $region64: #{tpu_custom_call.1} parent=1 // pred_region
      %s531 = ssub.s32 384, 384
      %532 = vsyncadd [#allocation4], %s531
      %s533 = sshll.u32 [#allocation10], 4
      %s534 = int_to_ptr.vmem [resolvable:$true] %s533
      %539 = dma.vmem_to_hbm [thread:$0]  %s534, 384, %s11, [#allocation4], 128, 128, 8
    $region65: #{tpu_custom_call.1} parent=1 // pred_fallthru
      _
    // Predicated region
    $region66: #{tpu_custom_call.1} parent=1 // pred_check
      _
    $region67: #{tpu_custom_call.1} parent=1 // pred_check_branch
      %541 = sbr.rel (0) target = $region69
    $region68: #{tpu_custom_call.1} parent=1 // pred_region
      %542 = dma.done [#allocation4], 384
    $region69: #{tpu_custom_call.1} parent=1 // pred_fallthru
      _
    %543 = vsyncpa [#allocation3], 1
    %544 = vsyncpa [#allocation6], 1
    %545 = vsyncpa [#allocation9], 1
    %546 = vsyncpa [#allocation4], 1

</llo_original>
